<compile_context>
chip_gen: v5e
topology: v5e:2x2
jax: 0.10.0
libtpu: 0.0.40
codegen_flags: <defaults>
</compile_context>

<pallas_src>
import jax
import jax.numpy as jnp
from jax.experimental import pallas as pl
from jax.experimental.pallas import tpu as pltpu


def _round_up(x: int, m: int) -> int:
    return ((x + m - 1) // m) * m


def _cdiv(a: int, b: int) -> int:
    return (a + b - 1) // b


def _vmem_capacity_bytes() -> int:
    """Physical VMEM per core; falls back to 64 MiB (safe on all generations)."""
    default = 64 * 1024 * 1024
    try:
        info = pltpu.get_tpu_info()
    except Exception:
        return default
    for name in ("vmem_capacity_bytes", "vmem_size_bytes", "vmem_bytes"):
        cap = getattr(info, name, None)
        if isinstance(cap, int) and cap > 0:
            return cap
    return default


def _tm_candidates(limit: int, sub: int):
    """Descending M-tile candidates: powers of two >= sub, plus `limit` itself."""
    cands = {limit}
    c = 8192
    while c >= sub:
        if c <= limit:
            cands.add(c)
        c //= 2
    return sorted(cands, reverse=True)


# --------------------------------------------------------------------------
# Kernels
# --------------------------------------------------------------------------

def _logreg_resident_kernel(x_ref, w_ref, b_ref, o_ref):
    # x_ref: (tm, ft_p)  w_ref: (ft_p, nb_p)  b_ref: (1, nb_p)  o_ref: (tm, nb_p)
    acc = jnp.dot(x_ref[...], w_ref[...], preferred_element_type=jnp.float32)
    o_ref[...] = (acc + b_ref[...].astype(jnp.float32)).astype(o_ref.dtype)


def _logreg_tiled_kernel(x_ref, w_ref, b_ref, o_ref, acc_ref):
    # x_ref: (tm, tk)  w_ref: (tk, tn)  b_ref: (1, tn)
    # o_ref: (tm, tn)  acc_ref: (tm, tn) f32 scratch
    k = pl.program_id(2)

    @pl.when(k == 0)
    def _():
        # Initialise with the broadcast bias -> no epilogue add pass.
        acc_ref[...] = jnp.broadcast_to(
            b_ref[...].astype(jnp.float32), acc_ref.shape)

    acc_ref[...] += jnp.dot(x_ref[...], w_ref[...],
                            preferred_element_type=jnp.float32)

    @pl.when(k == pl.num_programs(2) - 1)
    def _():
        o_ref[...] = acc_ref[...].astype(o_ref.dtype)


# --------------------------------------------------------------------------
# Wrapper
# --------------------------------------------------------------------------

def logreg_forward(seq, weight, bias, *, force_pallas=False, _force_tiled=False):
    """seq: (N, ft_in); weight: (nb_classes, ft_in) as in nn.Linear; bias: (nb_classes,)."""
    n, ft_in = seq.shape
    nb_classes, ft_in_w = weight.shape
    assert ft_in == ft_in_w, "weight/seq feature-dim mismatch"
    assert bias.shape == (nb_classes,)

    out_dtype = seq.dtype

    # Small-problem fallback: pallas_call fixed cost + 128-lane padding dwarfs
    # the work and blocks XLA fusion with neighbours.
    if not force_pallas and 2 * n * ft_in * nb_classes < (1 << 24):
        acc = jnp.dot(seq, weight.T, preferred_element_type=jnp.float32)
        return (acc + bias.astype(jnp.float32)).astype(out_dtype)

    x_item = jnp.dtype(seq.dtype).itemsize
    w_item = jnp.dtype(weight.dtype).itemsize
    o_item = jnp.dtype(out_dtype).itemsize
    b_item = jnp.dtype(bias.dtype).itemsize
    sub = max(8, 32 // x_item)                 # sublane multiple (f32:8, bf16:16, i8:32)

    cap = _vmem_capacity_bytes()
    budget = int(cap * 0.55)                   # tile budget (~35 MiB v7x, ~70 MiB v5e/v6e)
    vmem_limit = min(int(cap * 0.85), 128 * 1024 * 1024)

    # Lane-dense class padding; feature padding only if not 128-aligned.
    nb_p = _round_up(nb_classes, 128)
    ft_p = ft_in if ft_in % 128 == 0 else _round_up(ft_in, 128)

    # One-time layout change: (nb_classes, ft_in) -> (ft_p, nb_p), zero-padded.
    wt = weight.T
    if (ft_p, nb_p) != (ft_in, nb_classes):
        wt = jnp.pad(wt, ((0, ft_p - ft_in), (0, nb_p - nb_classes)))
    b_row = bias.reshape(1, nb_classes)
    if nb_p != nb_classes:
        b_row = jnp.pad(b_row, ((0, 0), (0, nb_p - nb_classes)))
    seq_p = seq
    if ft_p != ft_in:
        seq_p = jnp.pad(seq, ((0, 0), (0, ft_p - ft_in)))   # feature pad only (never batch)

    w_bytes = ft_p * nb_p * w_item
    b_bytes = nb_p * b_item
    n_ceil = _round_up(n, sub)

    # ---------------- weight-resident fast path ----------------
    # (2x accounting: constant index_map means a single fetch, but the
    #  pipeline still allocates default double buffers.)
    resident = (not _force_tiled) and (2 * w_bytes + 2 * b_bytes) <= budget // 2

    if resident:
        fixed = 2 * w_bytes + 2 * b_bytes

        def fits_r(tm):
            return fixed + 2 * tm * ft_p * x_item + 2 * tm * nb_p * o_item <= budget

        tm = None
        for cand in _tm_candidates(n_ceil, sub):
            if fits_r(cand):
                tm = cand
                break
        if tm is None:
            resident = False

    if resident:
        # Ensure >= 2 M tiles when possible so both TensorCores are used (v7x).
        while tm > sub and _cdiv(n, tm) < 2:
            tm = max(sub, _round_up(tm // 2, sub))

        grid = (_cdiv(n, tm),)
        cost = pl.CostEstimate(
            flops=2 * n * ft_p * nb_p,
            transcendentals=0,
            bytes_accessed=(n * ft_p * x_item + w_bytes + b_bytes
                            + n * nb_p * o_item),
        )
        out_p = pl.pallas_call(
            _logreg_resident_kernel,
            out_shape=jax.ShapeDtypeStruct((n, nb_p), out_dtype),
            grid_spec=pltpu.PrefetchScalarGridSpec(
                num_scalar_prefetch=0,
                grid=grid,
                in_specs=[
                    pl.BlockSpec((tm, ft_p), lambda i: (i, 0)),     # seq tile (streamed)
                    pl.BlockSpec((ft_p, nb_p), lambda i: (0, 0)),   # weight (fetched once)
                    pl.BlockSpec((1, nb_p), lambda i: (0, 0)),      # bias (fetched once)
                ],
                out_specs=pl.BlockSpec((tm, nb_p), lambda i: (i, 0)),
            ),
            compiler_params=pltpu.CompilerParams(
                dimension_semantics=("parallel",),
                vmem_limit_bytes=vmem_limit,
            ),
            cost_estimate=cost,
        )(seq_p, wt, b_row)
        return out_p[:, :nb_classes]

    # ---------------- general tiled path (classes + features tiled) ----------------
    tn_opts = [t for t in (512, 256, 128) if nb_p % t == 0]
    tk_opts = [t for t in (1024, 512, 256, 128) if ft_p % t == 0]

    def fits_t(tm, tn, tk):
        return (2 * tm * tk * x_item            # seq tile (double-buffered)
                + 2 * tk * tn * w_item          # weight tile (double-buffered)
                + 2 * tm * tn * o_item          # output tile (double-buffered)
                + tm * tn * 4                   # f32 accumulator scratch
                + 2 * tn * b_item) <= budget    # bias row

    pick = None
    for tn in tn_opts:
        for tk in tk_opts:
            for tm in _tm_candidates(n_ceil, sub):
                if fits_t(tm, tn, tk):
                    pick = (tm, tn, tk)
                    break
            if pick is not None:
                break
        if pick is not None:
            break
    if pick is None:
        pick = (sub, 128, 128)
    tm, tn, tk = pick

    n_tiles = nb_p // tn
    if n_tiles < 2:
        while tm > sub and _cdiv(n, tm) < 2:
            tm = max(sub, _round_up(tm // 2, sub))

    m_tiles = _cdiv(n, tm)
    grid = (m_tiles, n_tiles, ft_p // tk)

    cost = pl.CostEstimate(
        flops=2 * n * ft_p * nb_p,
        transcendentals=0,
        bytes_accessed=(n_tiles * n * ft_p * x_item      # seq re-read per class tile
                        + m_tiles * ft_p * nb_p * w_item # weight re-read per M tile
                        + n * nb_p * o_item + nb_p * b_item),
    )
    out_p = pl.pallas_call(
        _logreg_tiled_kernel,
        out_shape=jax.ShapeDtypeStruct((n, nb_p), out_dtype),
        grid_spec=pltpu.PrefetchScalarGridSpec(
            num_scalar_prefetch=0,
            grid=grid,
            in_specs=[
                pl.BlockSpec((tm, tk), lambda i, j, k: (i, k)),   # seq tile
                pl.BlockSpec((tk, tn), lambda i, j, k: (k, j)),   # weight tile (pre-transposed)
                pl.BlockSpec((1, tn), lambda i, j, k: (0, j)),    # bias tile
            ],
            out_specs=pl.BlockSpec((tm, tn), lambda i, j, k: (i, j)),
            scratch_shapes=[pltpu.VMEM((tm, tn), jnp.float32)],
        ),
        compiler_params=pltpu.CompilerParams(
            dimension_semantics=("parallel", "parallel", "arbitrary"),
            vmem_limit_bytes=vmem_limit,
        ),
        cost_estimate=cost,
    )(seq_p, wt, b_row)
    return out_p[:, :nb_classes]


def init_logreg_params(key, ft_in, nb_classes, dtype=jnp.float32):
    # Xavier-uniform weight (fan_in=ft_in, fan_out=nb_classes), zero bias,
    # matching LogReg.weights_init.
    bound = (6.0 / (ft_in + nb_classes)) ** 0.5
    weight = jax.random.uniform(
        key, (nb_classes, ft_in), dtype=dtype, minval=-bound, maxval=bound)
    bias = jnp.zeros((nb_classes,), dtype=dtype)
    return weight, bias


if __name__ == "__main__":
    key = jax.random.PRNGKey(0)
    k1, k2, k3, k4, k5, k6 = jax.random.split(key, 6)

    # Case 1: module-scale tiny shapes -> small-problem plain-JAX fallback.
    batch, ft_in, nb_classes = 8, 32, 16
    seq = jax.random.normal(k1, (batch, ft_in), dtype=jnp.float32)
    weight, bias = init_logreg_params(k2, ft_in, nb_classes)
    out = logreg_forward(seq, weight, bias)
    jax.block_until_ready(out)
    ref = seq @ weight.T + bias
    assert out.shape == (batch, nb_classes)
    assert jnp.allclose(out, ref, atol=1e-5, rtol=1e-5)

    # Case 2: moderate shapes -> Pallas weight-resident kernel path.
    batch, ft_in, nb_classes = 512, 384, 10
    seq = jax.random.normal(k3, (batch, ft_in), dtype=jnp.float32)
    weight, _ = init_logreg_params(k4, ft_in, nb_classes)
    bias = jnp.arange(nb_classes, dtype=jnp.float32) * 0.01  # non-zero to exercise the add
    out = logreg_forward(seq, weight, bias, force_pallas=True)
    jax.block_until_ready(out)
    ref = seq @ weight.T + bias
    assert out.shape == (batch, nb_classes)
    assert jnp.allclose(out, ref, atol=1e-4, rtol=1e-4)

    # Case 3: exercise the general tiled (class/feature-tiled) kernel path.
    batch, ft_in, nb_classes = 256, 512, 256
    seq = jax.random.normal(k5, (batch, ft_in), dtype=jnp.float32)
    weight, _ = init_logreg_params(k6, ft_in, nb_classes)
    bias = jnp.linspace(-0.5, 0.5, nb_classes, dtype=jnp.float32)
    out = logreg_forward(seq, weight, bias, force_pallas=True, _force_tiled=True)
    jax.block_until_ready(out)
    ref = seq @ weight.T + bias
    assert out.shape == (batch, nb_classes)
    assert jnp.allclose(out, ref, atol=1e-4, rtol=1e-4)

    print("KERNEL_OK")
</pallas_src>

<mosaic_0001>
module attributes {stable_mosaic.version = 11 : i64} {
  func.func @_logreg_resident_kernel(%arg0: i32, %arg1: memref<256x384xf32, #tpu.memory_space<vmem>>, %arg2: memref<384x128xf32, #tpu.memory_space<vmem>>, %arg3: memref<1x128xf32, #tpu.memory_space<vmem>>, %arg4: memref<256x128xf32, #tpu.memory_space<vmem>>) attributes {dimension_semantics = [#tpu.dimension_semantics<parallel>], iteration_bounds = array<i64: 2>, scalar_prefetch = 0 : i64, scratch_operands = 0 : i64, tpu.core_type = #tpu.core_type<tc>, window_params = [{transform_indices = @transform_0, window_bounds = array<i64: 256, 384>}, {pipeline_mode = #tpu.pipeline_mode<synchronous>, transform_indices = @transform_1, window_bounds = array<i64: 384, 128>}, {pipeline_mode = #tpu.pipeline_mode<synchronous>, transform_indices = @transform_2, window_bounds = array<i64: 1, 128>}, {transform_indices = @transform_3, window_bounds = array<i64: 256, 128>}]} {
    %c0 = arith.constant 0 : index
    %c0_0 = arith.constant 0 : index
    %0 = vector.load %arg1[%c0, %c0_0] : memref<256x384xf32, #tpu.memory_space<vmem>>, vector<256x384xf32>
    %c0_1 = arith.constant 0 : index
    %c0_2 = arith.constant 0 : index
    %1 = vector.load %arg2[%c0_1, %c0_2] : memref<384x128xf32, #tpu.memory_space<vmem>>, vector<384x128xf32>
    %cst = arith.constant dense<0.000000e+00> : vector<256x128xf32>
    %2 = tpu.matmul %0, %1, %cst {dimension_numbers = #tpu.dot_dimension_numbers<[1], [0], [0], [1], [0, 0, 1, 1], [], []>} : vector<256x384xf32>, vector<384x128xf32>, vector<256x128xf32> -> vector<256x128xf32>
    %c0_3 = arith.constant 0 : index
    %c0_4 = arith.constant 0 : index
    %3 = vector.load %arg3[%c0_3, %c0_4] : memref<1x128xf32, #tpu.memory_space<vmem>>, vector<1x128xf32>
    %4 = vector.broadcast %3 : vector<1x128xf32> to vector<256x128xf32>
    %5 = arith.addf %2, %4 : vector<256x128xf32>
    %c0_5 = arith.constant 0 : index
    %c0_6 = arith.constant 0 : index
    %6 = vector.load %arg4[%c0_5, %c0_6] : memref<256x128xf32, #tpu.memory_space<vmem>>, vector<256x128xf32>
    tpu.vector_store %arg4[%c0_5, %c0_6], %5 {strides = array<i32>} : memref<256x128xf32, #tpu.memory_space<vmem>>, vector<256x128xf32>,
    return
  }
  func.func @transform_0(%arg0: i32) -> (i32, i32) {
    %c0_i32 = arith.constant 0 : i32
    %c0_i32_0 = arith.constant 0 : i32
    return %arg0, %c0_i32 : i32, i32
  }
  func.func @transform_1(%arg0: i32) -> (i32, i32) {
    %c0_i32 = arith.constant 0 : i32
    %c0_i32_0 = arith.constant 0 : i32
    %c0_i32_1 = arith.constant 0 : i32
    return %c0_i32, %c0_i32_0 : i32, i32
  }
  func.func @transform_2(%arg0: i32) -> (i32, i32) {
    %c0_i32 = arith.constant 0 : i32
    %c0_i32_0 = arith.constant 0 : i32
    %c0_i32_1 = arith.constant 0 : i32
    return %c0_i32, %c0_i32_0 : i32, i32
  }
  func.func @transform_3(%arg0: i32) -> (i32, i32) {
    %c0_i32 = arith.constant 0 : i32
    %c0_i32_0 = arith.constant 0 : i32
    return %arg0, %c0_i32 : i32, i32
  }
}

</mosaic_0001>

<llo_original>
// kernel: tpu_custom_call.1
$region0: #{tpu_custom_call.1}
  #allocation0 [shape = 'u32[]', space=smem, size = 0x4, offset = 0x4, fixed_abs, tag = 'smem constant byte address 0x4 - core index']
  #allocation1 [shape = 'u32[72,128]{1,0:T(1,128)}', space=vmem, size = 0x9000, scoped, tag = 'internal scratch']
  %s0 = inlined_call_operand.hbm [shape: f32[512,384], index: 0, kind: input, shape index: {}]
  %s1 = inlined_call_operand.hbm [shape: f32[384,128], index: 1, kind: input, shape index: {}]
  %s2 = inlined_call_operand.vmem [shape: f32[1,128], index: 2, kind: input, shape index: {}]
  %s3 = inlined_call_operand.hbm [shape: f32[512,128], index: 3, kind: output, shape index: {}]
  %s4 = sld [smem:[#allocation0]]
  $region53: #{tpu_custom_call.1} parent=0
    _
  %s6 = ssub.s32 1, %s4
  %s7 = scalar_select 0, %s6, %s4
  $region1: #{tpu_custom_call.1} parent=0
    #allocation2 [shape = 'u8[786432]{0}', space=vmem, size = 0xc0000, scoped, tag = 'input window, operand 0']
    #allocation3 [shape = 's32[2]{0}', space=sflag, size = 0x8, scoped, tag = 'scoped memory for tpu_custom_call.1']
    #allocation4 [shape = 's32[2]{0}', space=sflag, size = 0x8, scoped, tag = 'scoped memory for tpu_custom_call.1']
    #allocation5 [shape = 'u8[196608]{0}', space=vmem, size = 0x30000, scoped, tag = 'input window, operand 1, single buffered']
    #allocation6 [shape = 's32[1]{0}', space=sflag, size = 0x4, scoped, tag = 'scoped memory for tpu_custom_call.1']
    #allocation7 [shape = 'u8[262144]{0}', space=vmem, size = 0x40000, scoped, tag = 'output window, operand 0']
    %8 = vsyncpa [#allocation3], 0
    %s9 = scalar_lea.sflag [#allocation3], 1
    %10 = vsyncpa %s9, 0
    %11 = vsyncpa [#allocation6], 0
    %12 = vsyncpa [#allocation4], 0
    %s13 = scalar_lea.sflag [#allocation4], 1
    %14 = vsyncpa %s13, 0
    loop: start=0, step=1, limit=4
    $region2: #{tpu_custom_call.1} parent=1 // loop_pre_header
      _
    $region3: #{tpu_custom_call.1} parent=1 // loop_header
      %s16 = sphi 0, %s20
      %p17 = scmp.ge.s32.totalorder %s16, 4
      %s26 = sphi 0, %s28
      %s29 = sphi 0, %s26
      %s30 = sphi 0, %s29
      %s46 = sphi 0, %s30
      %s50 = sphi 0, %s50
      %s52 = sphi 0, %s50
      %s53 = sphi 0, %s52
      %s67 = sphi 0, %s53
      %s71 = sphi 0, %s71
      %s73 = sphi 0, %s71
      %s74 = sphi 0, %s73
      %s88 = sphi 0, %s74
      %s94 = sphi 0, %s96
      %s97 = sphi 0, %s94
      %s98 = sphi 0, %s97
      %s114 = sphi 0, %s98
    $region4: #{tpu_custom_call.1} parent=1 // loop_header_branch
      %19 = sbr.rel (%p17) target = $region8
    $region5: #{tpu_custom_call.1} parent=1 // loop_body
      %s21 = ssub.s32 %s16, 1
      %s22 = ssub.s32 %s16, 2
      %s23 = sadd.s32 %s16, 1
      %s24 = ssub.s32 %s16, %s23
      %p25 = scmp.eq.s32.totalorder %s24, 0
      %s27 = sadd.s32 %s26, 1
      %s28 = scalar_select %p25, %s26, %s27
      %p31 = pneg %p25
      %p32 = scmp.eq.s32.totalorder %s16, 1
      %p33 = por %p31, %p32
      %p34 = scmp.ne.s32.totalorder %s26, %s29
      %p35 = scmp.eq.s32.totalorder %s16, 0
      %p36 = por %p34, %p35
      %p37 = scmp.ne.s32.totalorder %s26, %s29
      %p38 = scmp.eq.s32.totalorder %s21, 1
      %p39 = por %p37, %p38
      %p40 = scmp.ne.s32.totalorder %s29, %s30
      %p41 = scmp.eq.s32.totalorder %s21, 0
      %p42 = por %p40, %p41
      %p43 = scmp.ne.s32.totalorder %s29, %s30
      %p44 = scmp.eq.s32.totalorder %s22, 1
      %p45 = por %p43, %p44
      %p47 = scmp.ne.s32.totalorder %s30, %s46
      %p48 = scmp.eq.s32.totalorder %s22, 0
      %p49 = por %p47, %p48
      %s51 = sadd.s32 %s50, 1
      %p54 = scmp.eq.s32.totalorder %s16, 1
      %p55 = scmp.ne.s32.totalorder %s50, %s52
      %p56 = scmp.eq.s32.totalorder %s16, 0
      %p57 = por %p55, %p56
      %p58 = scmp.ne.s32.totalorder %s50, %s52
      %p59 = scmp.eq.s32.totalorder %s21, 1
      %p60 = por %p58, %p59
      %p61 = scmp.ne.s32.totalorder %s52, %s53
      %p62 = scmp.eq.s32.totalorder %s21, 0
      %p63 = por %p61, %p62
      %p64 = scmp.ne.s32.totalorder %s52, %s53
      %p65 = scmp.eq.s32.totalorder %s22, 1
      %p66 = por %p64, %p65
      %p68 = scmp.ne.s32.totalorder %s53, %s67
      %p69 = scmp.eq.s32.totalorder %s22, 0
      %p70 = por %p68, %p69
      %s72 = sadd.s32 %s71, 1
      %p75 = scmp.eq.s32.totalorder %s16, 1
      %p76 = scmp.ne.s32.totalorder %s71, %s73
      %p77 = scmp.eq.s32.totalorder %s16, 0
      %p78 = por %p76, %p77
      %p79 = scmp.ne.s32.totalorder %s71, %s73
      %p80 = scmp.eq.s32.totalorder %s21, 1
      %p81 = por %p79, %p80
      %p82 = scmp.ne.s32.totalorder %s73, %s74
      %p83 = scmp.eq.s32.totalorder %s21, 0
      %p84 = por %p82, %p83
      %p85 = scmp.ne.s32.totalorder %s73, %s74
      %p86 = scmp.eq.s32.totalorder %s22, 1
      %p87 = por %p85, %p86
      %p89 = scmp.ne.s32.totalorder %s74, %s88
      %p90 = scmp.eq.s32.totalorder %s22, 0
      %p91 = por %p89, %p90
      %s92 = ssub.s32 %s16, %s23
      %p93 = scmp.eq.s32.totalorder %s92, 0
      %s95 = sadd.s32 %s94, 1
      %s96 = scalar_select %p93, %s94, %s95
      %p99 = pneg %p93
      %p100 = scmp.eq.s32.totalorder %s16, 1
      %p101 = por %p99, %p100
      %p102 = scmp.ne.s32.totalorder %s94, %s97
      %p103 = scmp.eq.s32.totalorder %s16, 0
      %p104 = por %p102, %p103
      %p105 = scmp.ne.s32.totalorder %s94, %s97
      %p106 = scmp.eq.s32.totalorder %s21, 1
      %p107 = por %p105, %p106
      %p108 = scmp.ne.s32.totalorder %s97, %s98
      %p109 = scmp.eq.s32.totalorder %s21, 0
      %p110 = por %p108, %p109
      %p111 = scmp.ne.s32.totalorder %s97, %s98
      %p112 = scmp.eq.s32.totalorder %s22, 1
      %p113 = por %p111, %p112
      %p115 = scmp.ne.s32.totalorder %s98, %s114
      %p116 = scmp.eq.s32.totalorder %s22, 0
      %p117 = por %p115, %p116
      %p118 = scmp.le.s32.totalorder 1, %s16
      %p119 = scmp.lt.s32.totalorder %s16, 3
      %p120 = pnand %p118, %p119
      %p121 = pneg %p120
      // Predicated region
      $region9: #{tpu_custom_call.1} parent=5 // pred_check
        _
      $region10: #{tpu_custom_call.1} parent=5 // pred_check_branch
        %123 = sbr.rel (%p120) target = $region12
      $region11: #{tpu_custom_call.1} parent=5 // pred_region
        %s124 = ssub.s32 %s16, 1
        // Predicated region
        $region13: #{tpu_custom_call.1} parent=11 // pred_check
          %p125 = pneg %p63
        $region14: #{tpu_custom_call.1} parent=11 // pred_check_branch
          %127 = sbr.rel (%p125) target = $region16
        $region15: #{tpu_custom_call.1} parent=11 // pred_region
          %129 = vsyncadd [#allocation6], 0
          %s130 = sshll.u32 %s1, 4
          %s131 = int_to_ptr.hbm [resolvable:$true] %s130
          %s132 = sshll.u32 [#allocation5], 4
          %s133 = int_to_ptr.vmem [resolvable:$true] %s132
          %138 = dma.hbm_to_vmem [thread:$0]  %s131, 6144, %s133, [#allocation6], 128, 128, 8
        $region16: #{tpu_custom_call.1} parent=11 // pred_fallthru
          _
        // Predicated region
        $region17: #{tpu_custom_call.1} parent=11 // pred_check
          %p139 = pneg %p84
        $region18: #{tpu_custom_call.1} parent=11 // pred_check_branch
          %141 = sbr.rel (%p139) target = $region20
        $region19: #{tpu_custom_call.1} parent=11 // pred_region
          _
        $region20: #{tpu_custom_call.1} parent=11 // pred_fallthru
          _
      $region12: #{tpu_custom_call.1} parent=5 // pred_fallthru
        _
      %p142 = scmp.lt.s32.totalorder %s16, 2
      // Predicated region
      $region21: #{tpu_custom_call.1} parent=5 // pred_check
        %p143 = pneg %p142
      $region22: #{tpu_custom_call.1} parent=5 // pred_check_branch
        %145 = sbr.rel (%p143) target = $region24
      $region23: #{tpu_custom_call.1} parent=5 // pred_region
        // Predicated region
        $region25: #{tpu_custom_call.1} parent=23 // pred_check
          %p146 = pneg %p36
        $region26: #{tpu_custom_call.1} parent=23 // pred_check_branch
          %148 = sbr.rel (%p146) target = $region28
        $region27: #{tpu_custom_call.1} parent=23 // pred_region
          %s149 = sand.u32 %s26, 1
          %s150 = scalar_lea.sflag [#allocation3], %s149
          %s151 = sand.u32 %s26, 1
          %s152 = smul.addr %s151, 768
          %s153 = scalar_lea.vmem [#allocation2], %s152
          %s154 = smul.u32 32, %s16
          %156 = vsyncadd %s150, 0
          %s157 = smul.addr %s154, 3
          %s158 = smul.addr %s157, 8
          %s159 = scalar_lea.hbm %s0, %s158
          %s160 = sshll.u32 %s159, 4
          %s161 = int_to_ptr.hbm [resolvable:$true] %s160
          %s162 = sshll.u32 %s153, 4
          %s163 = int_to_ptr.vmem [resolvable:$true] %s162
          %168 = dma.hbm_to_vmem [thread:$0]  %s161, 12288, %s163, %s150, 384, 384, 24
        $region28: #{tpu_custom_call.1} parent=23 // pred_fallthru
          _
      $region24: #{tpu_custom_call.1} parent=5 // pred_fallthru
        _
      %p169 = scmp.le.s32.totalorder 1, %s16
      %p170 = scmp.lt.s32.totalorder %s16, 3
      %p171 = pnand %p169, %p170
      %p172 = pneg %p171
      // Predicated region
      $region29: #{tpu_custom_call.1} parent=5 // pred_check
        _
      $region30: #{tpu_custom_call.1} parent=5 // pred_check_branch
        %174 = sbr.rel (%p171) target = $region32
      $region31: #{tpu_custom_call.1} parent=5 // pred_region
        %s175 = ssub.s32 %s16, 1
        %s176 = sand.u32 %s29, 1
        %s177 = scalar_lea.sflag [#allocation3], %s176
        %s178 = sand.u32 %s29, 1
        %s179 = smul.addr %s178, 768
        %s180 = scalar_lea.vmem [#allocation2], %s179
        // Predicated region
        $region33: #{tpu_custom_call.1} parent=31 // pred_check
          %p181 = pneg %p42
        $region34: #{tpu_custom_call.1} parent=31 // pred_check_branch
          %183 = sbr.rel (%p181) target = $region36
        $region35: #{tpu_custom_call.1} parent=31 // pred_region
          %185 = dma.done %s177, 12288
        $region36: #{tpu_custom_call.1} parent=31 // pred_fallthru
          _
        // Predicated region
        $region37: #{tpu_custom_call.1} parent=31 // pred_check
          %p186 = pneg %p63
        $region38: #{tpu_custom_call.1} parent=31 // pred_check_branch
          %188 = sbr.rel (%p186) target = $region40
        $region39: #{tpu_custom_call.1} parent=31 // pred_region
          %190 = dma.done [#allocation6], 6144
        $region40: #{tpu_custom_call.1} parent=31 // pred_fallthru
          _
        %s191 = sand.u32 %s29, 1
        %s192 = scalar_lea.sflag [#allocation3], %s191
        %s193 = sand.u32 %s29, 1
        %s194 = smul.addr %s193, 768
        %s195 = scalar_lea.vmem [#allocation2], %s194
        %p196 = pneg %p42
        %p197 = pneg %p39
        %p198 = pneg %p63
        %p199 = pneg %p60
        %p200 = pneg %p84
        %p201 = pneg %p81
        %p202 = pneg %p110
        %p203 = pneg %p107
        %s204 = sand.u32 %s97, 1
        %s205 = scalar_lea.sflag [#allocation4], %s204
        %s206 = sand.u32 %s97, 1
        %s207 = smul.addr %s206, 256
        %s208 = scalar_lea.vmem [#allocation7], %s207
        %s209 = smul.u32 32, %s21
        %s210 = smul.u32 32, %s21
        %v211 = vld [vmem:[%s180] sm:$0xff]
        %v212 = vld [vmem:[%s180 + $0x8] sm:$0xff]
        %v213 = vld [vmem:[%s180 + $0x10] sm:$0xff]
        %v214 = vld [vmem:[%s180 + $0x18] sm:$0xff]
        %v215 = vld [vmem:[%s180 + $0x20] sm:$0xff]
        %v216 = vld [vmem:[%s180 + $0x28] sm:$0xff]
        %v217 = vld [vmem:[%s180 + $0x30] sm:$0xff]
        %v218 = vld [vmem:[%s180 + $0x38] sm:$0xff]
        %v219 = vld [vmem:[%s180 + $0x40] sm:$0xff]
        %v220 = vld [vmem:[%s180 + $0x48] sm:$0xff]
        %v221 = vld [vmem:[%s180 + $0x50] sm:$0xff]
        %v222 = vld [vmem:[%s180 + $0x58] sm:$0xff]
        %v223 = vld [vmem:[%s180 + $0x60] sm:$0xff]
        %v224 = vld [vmem:[%s180 + $0x68] sm:$0xff]
        %v225 = vld [vmem:[%s180 + $0x70] sm:$0xff]
        %v226 = vld [vmem:[%s180 + $0x78] sm:$0xff]
        %v227 = vld [vmem:[%s180 + $0x80] sm:$0xff]
        %v228 = vld [vmem:[%s180 + $0x88] sm:$0xff]
        %v229 = vld [vmem:[%s180 + $0x90] sm:$0xff]
        %v230 = vld [vmem:[%s180 + $0x98] sm:$0xff]
        %v231 = vld [vmem:[%s180 + $0xa0] sm:$0xff]
        %v232 = vld [vmem:[%s180 + $0xa8] sm:$0xff]
        %v233 = vld [vmem:[%s180 + $0xb0] sm:$0xff]
        %v234 = vld [vmem:[%s180 + $0xb8] sm:$0xff]
        %v235 = vld [vmem:[%s180 + $0xc0] sm:$0xff]
        %v236 = vld [vmem:[%s180 + $0xc8] sm:$0xff]
        %v237 = vld [vmem:[%s180 + $0xd0] sm:$0xff]
        %v238 = vld [vmem:[%s180 + $0xd8] sm:$0xff]
        %v239 = vld [vmem:[%s180 + $0xe0] sm:$0xff]
        %v240 = vld [vmem:[%s180 + $0xe8] sm:$0xff]
        %v241 = vld [vmem:[%s180 + $0xf0] sm:$0xff]
        %v242 = vld [vmem:[%s180 + $0xf8] sm:$0xff]
        %v243 = vld [vmem:[%s180 + $0x100] sm:$0xff]
        %v244 = vld [vmem:[%s180 + $0x108] sm:$0xff]
        %v245 = vld [vmem:[%s180 + $0x110] sm:$0xff]
        %v246 = vld [vmem:[%s180 + $0x118] sm:$0xff]
        %v247 = vld [vmem:[%s180 + $0x120] sm:$0xff]
        %v248 = vld [vmem:[%s180 + $0x128] sm:$0xff]
        %v249 = vld [vmem:[%s180 + $0x130] sm:$0xff]
        %v250 = vld [vmem:[%s180 + $0x138] sm:$0xff]
        %v251 = vld [vmem:[%s180 + $0x140] sm:$0xff]
        %v252 = vld [vmem:[%s180 + $0x148] sm:$0xff]
        %v253 = vld [vmem:[%s180 + $0x150] sm:$0xff]
        %v254 = vld [vmem:[%s180 + $0x158] sm:$0xff]
        %v255 = vld [vmem:[%s180 + $0x160] sm:$0xff]
        %v256 = vld [vmem:[%s180 + $0x168] sm:$0xff]
        %v257 = vld [vmem:[%s180 + $0x170] sm:$0xff]
        %v258 = vld [vmem:[%s180 + $0x178] sm:$0xff]
        %v259 = vld [vmem:[%s180 + $0x180] sm:$0xff]
        %v260 = vld [vmem:[%s180 + $0x188] sm:$0xff]
        %v261 = vld [vmem:[%s180 + $0x190] sm:$0xff]
        %v262 = vld [vmem:[%s180 + $0x198] sm:$0xff]
        %v263 = vld [vmem:[%s180 + $0x1a0] sm:$0xff]
        %v264 = vld [vmem:[%s180 + $0x1a8] sm:$0xff]
        %v265 = vld [vmem:[%s180 + $0x1b0] sm:$0xff]
        %v266 = vld [vmem:[%s180 + $0x1b8] sm:$0xff]
        %v267 = vld [vmem:[%s180 + $0x1c0] sm:$0xff]
        %v268 = vld [vmem:[%s180 + $0x1c8] sm:$0xff]
        %v269 = vld [vmem:[%s180 + $0x1d0] sm:$0xff]
        %v270 = vld [vmem:[%s180 + $0x1d8] sm:$0xff]
        %v271 = vld [vmem:[%s180 + $0x1e0] sm:$0xff]
        %v272 = vld [vmem:[%s180 + $0x1e8] sm:$0xff]
        %v273 = vld [vmem:[%s180 + $0x1f0] sm:$0xff]
        %v274 = vld [vmem:[%s180 + $0x1f8] sm:$0xff]
        %v275 = vld [vmem:[%s180 + $0x200] sm:$0xff]
        %v276 = vld [vmem:[%s180 + $0x208] sm:$0xff]
        %v277 = vld [vmem:[%s180 + $0x210] sm:$0xff]
        %v278 = vld [vmem:[%s180 + $0x218] sm:$0xff]
        %v279 = vld [vmem:[%s180 + $0x220] sm:$0xff]
        %v280 = vld [vmem:[%s180 + $0x228] sm:$0xff]
        %v281 = vld [vmem:[%s180 + $0x230] sm:$0xff]
        %v282 = vld [vmem:[%s180 + $0x238] sm:$0xff]
        %v283 = vld [vmem:[%s180 + $0x240] sm:$0xff]
        %v284 = vld [vmem:[%s180 + $0x248] sm:$0xff]
        %v285 = vld [vmem:[%s180 + $0x250] sm:$0xff]
        %v286 = vld [vmem:[%s180 + $0x258] sm:$0xff]
        %v287 = vld [vmem:[%s180 + $0x260] sm:$0xff]
        %v288 = vld [vmem:[%s180 + $0x268] sm:$0xff]
        %v289 = vld [vmem:[%s180 + $0x270] sm:$0xff]
        %v290 = vld [vmem:[%s180 + $0x278] sm:$0xff]
        %v291 = vld [vmem:[%s180 + $0x280] sm:$0xff]
        %v292 = vld [vmem:[%s180 + $0x288] sm:$0xff]
        %v293 = vld [vmem:[%s180 + $0x290] sm:$0xff]
        %v294 = vld [vmem:[%s180 + $0x298] sm:$0xff]
        %v295 = vld [vmem:[%s180 + $0x2a0] sm:$0xff]
        %v296 = vld [vmem:[%s180 + $0x2a8] sm:$0xff]
        %v297 = vld [vmem:[%s180 + $0x2b0] sm:$0xff]
        %v298 = vld [vmem:[%s180 + $0x2b8] sm:$0xff]
        %v299 = vld [vmem:[%s180 + $0x2c0] sm:$0xff]
        %v300 = vld [vmem:[%s180 + $0x2c8] sm:$0xff]
        %v301 = vld [vmem:[%s180 + $0x2d0] sm:$0xff]
        %v302 = vld [vmem:[%s180 + $0x2d8] sm:$0xff]
        %v303 = vld [vmem:[%s180 + $0x2e0] sm:$0xff]
        %v304 = vld [vmem:[%s180 + $0x2e8] sm:$0xff]
        %v305 = vld [vmem:[%s180 + $0x2f0] sm:$0xff]
        %v306 = vld [vmem:[%s180 + $0x2f8] sm:$0xff]
        %v307 = vld [vmem:[#allocation5] sm:$0xff]
        %v308 = vld [vmem:[#allocation5 + $0x8] sm:$0xff]
        %v309 = vld [vmem:[#allocation5 + $0x10] sm:$0xff]
        %v310 = vld [vmem:[#allocation5 + $0x18] sm:$0xff]
        %v311 = vld [vmem:[#allocation5 + $0x20] sm:$0xff]
        %v312 = vld [vmem:[#allocation5 + $0x28] sm:$0xff]
        %v313 = vld [vmem:[#allocation5 + $0x30] sm:$0xff]
        %v314 = vld [vmem:[#allocation5 + $0x38] sm:$0xff]
        %v315 = vld [vmem:[#allocation5 + $0x40] sm:$0xff]
        %v316 = vld [vmem:[#allocation5 + $0x48] sm:$0xff]
        %v317 = vld [vmem:[#allocation5 + $0x50] sm:$0xff]
        %v318 = vld [vmem:[#allocation5 + $0x58] sm:$0xff]
        %v319 = vld [vmem:[#allocation5 + $0x60] sm:$0xff]
        %v320 = vld [vmem:[#allocation5 + $0x68] sm:$0xff]
        %v321 = vld [vmem:[#allocation5 + $0x70] sm:$0xff]
        %v322 = vld [vmem:[#allocation5 + $0x78] sm:$0xff]
        %v323 = vld [vmem:[#allocation5 + $0x80] sm:$0xff]
        %v324 = vld [vmem:[#allocation5 + $0x88] sm:$0xff]
        %v325 = vld [vmem:[#allocation5 + $0x90] sm:$0xff]
        %v326 = vld [vmem:[#allocation5 + $0x98] sm:$0xff]
        %v327 = vld [vmem:[#allocation5 + $0xa0] sm:$0xff]
        %v328 = vld [vmem:[#allocation5 + $0xa8] sm:$0xff]
        %v329 = vld [vmem:[#allocation5 + $0xb0] sm:$0xff]
        %v330 = vld [vmem:[#allocation5 + $0xb8] sm:$0xff]
        %v331 = vld [vmem:[#allocation5 + $0xc0] sm:$0xff]
        %v332 = vld [vmem:[#allocation5 + $0xc8] sm:$0xff]
        %v333 = vld [vmem:[#allocation5 + $0xd0] sm:$0xff]
        %v334 = vld [vmem:[#allocation5 + $0xd8] sm:$0xff]
        %v335 = vld [vmem:[#allocation5 + $0xe0] sm:$0xff]
        %v336 = vld [vmem:[#allocation5 + $0xe8] sm:$0xff]
        %v337 = vld [vmem:[#allocation5 + $0xf0] sm:$0xff]
        %v338 = vld [vmem:[#allocation5 + $0xf8] sm:$0xff]
        %v339 = vld [vmem:[#allocation5 + $0x100] sm:$0xff]
        %v340 = vld [vmem:[#allocation5 + $0x108] sm:$0xff]
        %v341 = vld [vmem:[#allocation5 + $0x110] sm:$0xff]
        %v342 = vld [vmem:[#allocation5 + $0x118] sm:$0xff]
        %v343 = vld [vmem:[#allocation5 + $0x120] sm:$0xff]
        %v344 = vld [vmem:[#allocation5 + $0x128] sm:$0xff]
        %v345 = vld [vmem:[#allocation5 + $0x130] sm:$0xff]
        %v346 = vld [vmem:[#allocation5 + $0x138] sm:$0xff]
        %v347 = vld [vmem:[#allocation5 + $0x140] sm:$0xff]
        %v348 = vld [vmem:[#allocation5 + $0x148] sm:$0xff]
        %v349 = vld [vmem:[#allocation5 + $0x150] sm:$0xff]
        %v350 = vld [vmem:[#allocation5 + $0x158] sm:$0xff]
        %v351 = vld [vmem:[#allocation5 + $0x160] sm:$0xff]
        %v352 = vld [vmem:[#allocation5 + $0x168] sm:$0xff]
        %v353 = vld [vmem:[#allocation5 + $0x170] sm:$0xff]
        %v354 = vld [vmem:[#allocation5 + $0x178] sm:$0xff]
        %v355 = vld [vmem:[%s2] sm:$0x1]
        %v357 = vperm.slane %v355, 0
        %359 = vmatpush.msra.mxu0 %v322
        %360 = vmatpush.msra.mxu0 %v321
        %361 = vmatpush.msra.mxu0 %v320
        %362 = vmatpush.msra.mxu0 %v319
        %363 = vmatpush.msra.mxu0 %v318
        %364 = vmatpush.msra.mxu0 %v317
        %365 = vmatpush.msra.mxu0 %v316
        %366 = vmatpush.msra.mxu0 %v315
        %367 = vmatpush.msra.mxu0 %v314
        %368 = vmatpush.msra.mxu0 %v313
        %369 = vmatpush.msra.mxu0 %v312
        %370 = vmatpush.msra.mxu0 %v311
        %371 = vmatpush.msra.mxu0 %v310
        %372 = vmatpush.msra.mxu0 %v309
        %373 = vmatpush.msra.mxu0 %v308
        %374 = vmatpush.msra.mxu0 %v307
        %375 = vmatmul.f32.gmra.mxu0 %v211
        %v376 = vpop.f32.mrf.mxu0
        %v377 = vadd.f32 %v357, %v376
        %378 = vmatmul.f32.gmra.mxu0 %v214
        %v379 = vpop.f32.mrf.mxu0
        %v380 = vadd.f32 %v357, %v379
        %381 = vmatmul.f32.gmra.mxu0 %v217
        %v382 = vpop.f32.mrf.mxu0
        %v383 = vadd.f32 %v357, %v382
        %384 = vmatmul.f32.gmra.mxu0 %v220
        %v385 = vpop.f32.mrf.mxu0
        %v386 = vadd.f32 %v357, %v385
        %387 = vmatmul.f32.gmra.mxu0 %v223
        %v388 = vpop.f32.mrf.mxu0
        %v389 = vadd.f32 %v357, %v388
        %390 = vmatmul.f32.gmra.mxu0 %v226
        %v391 = vpop.f32.mrf.mxu0
        %v392 = vadd.f32 %v357, %v391
        %393 = vmatmul.f32.gmra.mxu0 %v229
        %v394 = vpop.f32.mrf.mxu0
        %v395 = vadd.f32 %v357, %v394
        %396 = vmatmul.f32.gmra.mxu0 %v232
        %v397 = vpop.f32.mrf.mxu0
        %v398 = vadd.f32 %v357, %v397
        %399 = vmatmul.f32.gmra.mxu0 %v235
        %v400 = vpop.f32.mrf.mxu0
        %v401 = vadd.f32 %v357, %v400
        %402 = vmatmul.f32.gmra.mxu0 %v238
        %v403 = vpop.f32.mrf.mxu0
        %v404 = vadd.f32 %v357, %v403
        %405 = vmatmul.f32.gmra.mxu0 %v241
        %v406 = vpop.f32.mrf.mxu0
        %v407 = vadd.f32 %v357, %v406
        %408 = vmatmul.f32.gmra.mxu0 %v244
        %v409 = vpop.f32.mrf.mxu0
        %v410 = vadd.f32 %v357, %v409
        %411 = vmatmul.f32.gmra.mxu0 %v247
        %v412 = vpop.f32.mrf.mxu0
        %v413 = vadd.f32 %v357, %v412
        %414 = vmatmul.f32.gmra.mxu0 %v250
        %v415 = vpop.f32.mrf.mxu0
        %v416 = vadd.f32 %v357, %v415
        %417 = vmatmul.f32.gmra.mxu0 %v253
        %v418 = vpop.f32.mrf.mxu0
        %v419 = vadd.f32 %v357, %v418
        %420 = vmatmul.f32.gmra.mxu0 %v256
        %v421 = vpop.f32.mrf.mxu0
        %v422 = vadd.f32 %v357, %v421
        %423 = vmatmul.f32.gmra.mxu0 %v259
        %v424 = vpop.f32.mrf.mxu0
        %v425 = vadd.f32 %v357, %v424
        %426 = vmatmul.f32.gmra.mxu0 %v262
        %v427 = vpop.f32.mrf.mxu0
        %v428 = vadd.f32 %v357, %v427
        %429 = vmatmul.f32.gmra.mxu0 %v265
        %v430 = vpop.f32.mrf.mxu0
        %v431 = vadd.f32 %v357, %v430
        %432 = vmatmul.f32.gmra.mxu0 %v268
        %v433 = vpop.f32.mrf.mxu0
        %v434 = vadd.f32 %v357, %v433
        %435 = vmatmul.f32.gmra.mxu0 %v271
        %v436 = vpop.f32.mrf.mxu0
        %v437 = vadd.f32 %v357, %v436
        %438 = vmatmul.f32.gmra.mxu0 %v274
        %v439 = vpop.f32.mrf.mxu0
        %v440 = vadd.f32 %v357, %v439
        %441 = vmatmul.f32.gmra.mxu0 %v277
        %v442 = vpop.f32.mrf.mxu0
        %v443 = vadd.f32 %v357, %v442
        %444 = vmatmul.f32.gmra.mxu0 %v280
        %v445 = vpop.f32.mrf.mxu0
        %v446 = vadd.f32 %v357, %v445
        %447 = vmatmul.f32.gmra.mxu0 %v283
        %v448 = vpop.f32.mrf.mxu0
        %v449 = vadd.f32 %v357, %v448
        %450 = vmatmul.f32.gmra.mxu0 %v286
        %v451 = vpop.f32.mrf.mxu0
        %v452 = vadd.f32 %v357, %v451
        %453 = vmatmul.f32.gmra.mxu0 %v289
        %v454 = vpop.f32.mrf.mxu0
        %v455 = vadd.f32 %v357, %v454
        %456 = vmatmul.f32.gmra.mxu0 %v292
        %v457 = vpop.f32.mrf.mxu0
        %v458 = vadd.f32 %v357, %v457
        %459 = vmatmul.f32.gmra.mxu0 %v295
        %v460 = vpop.f32.mrf.mxu0
        %v461 = vadd.f32 %v357, %v460
        %462 = vmatmul.f32.gmra.mxu0 %v298
        %v463 = vpop.f32.mrf.mxu0
        %v464 = vadd.f32 %v357, %v463
        %465 = vmatmul.f32.gmra.mxu0 %v301
        %v466 = vpop.f32.mrf.mxu0
        %v467 = vadd.f32 %v357, %v466
        %468 = vmatmul.f32.gmra.mxu0 %v304
        %v469 = vpop.f32.mrf.mxu0
        %v470 = vadd.f32 %v357, %v469
        %471 = vdwg.mxu0
        %472 = vmatpush.msra.mxu0 %v338
        %473 = vmatpush.msra.mxu0 %v337
        %474 = vmatpush.msra.mxu0 %v336
        %475 = vmatpush.msra.mxu0 %v335
        %476 = vmatpush.msra.mxu0 %v334
        %477 = vmatpush.msra.mxu0 %v333
        %478 = vmatpush.msra.mxu0 %v332
        %479 = vmatpush.msra.mxu0 %v331
        %480 = vmatpush.msra.mxu0 %v330
        %481 = vmatpush.msra.mxu0 %v329
        %482 = vmatpush.msra.mxu0 %v328
        %483 = vmatpush.msra.mxu0 %v327
        %484 = vmatpush.msra.mxu0 %v326
        %485 = vmatpush.msra.mxu0 %v325
        %486 = vmatpush.msra.mxu0 %v324
        %487 = vmatpush.msra.mxu0 %v323
        %488 = vmatmul.f32.gmra.mxu0 %v212
        %v489 = vpop.f32.mrf.mxu0
        %v490 = vadd.f32 %v377, %v489
        %491 = vmatmul.f32.gmra.mxu0 %v215
        %v492 = vpop.f32.mrf.mxu0
        %v493 = vadd.f32 %v380, %v492
        %494 = vmatmul.f32.gmra.mxu0 %v218
        %v495 = vpop.f32.mrf.mxu0
        %v496 = vadd.f32 %v383, %v495
        %497 = vmatmul.f32.gmra.mxu0 %v221
        %v498 = vpop.f32.mrf.mxu0
        %v499 = vadd.f32 %v386, %v498
        %500 = vmatmul.f32.gmra.mxu0 %v224
        %v501 = vpop.f32.mrf.mxu0
        %v502 = vadd.f32 %v389, %v501
        %503 = vmatmul.f32.gmra.mxu0 %v227
        %v504 = vpop.f32.mrf.mxu0
        %v505 = vadd.f32 %v392, %v504
        %506 = vmatmul.f32.gmra.mxu0 %v230
        %v507 = vpop.f32.mrf.mxu0
        %v508 = vadd.f32 %v395, %v507
        %509 = vmatmul.f32.gmra.mxu0 %v233
        %v510 = vpop.f32.mrf.mxu0
        %v511 = vadd.f32 %v398, %v510
        %512 = vmatmul.f32.gmra.mxu0 %v236
        %v513 = vpop.f32.mrf.mxu0
        %v514 = vadd.f32 %v401, %v513
        %515 = vmatmul.f32.gmra.mxu0 %v239
        %v516 = vpop.f32.mrf.mxu0
        %v517 = vadd.f32 %v404, %v516
        %518 = vmatmul.f32.gmra.mxu0 %v242
        %v519 = vpop.f32.mrf.mxu0
        %v520 = vadd.f32 %v407, %v519
        %521 = vmatmul.f32.gmra.mxu0 %v245
        %v522 = vpop.f32.mrf.mxu0
        %v523 = vadd.f32 %v410, %v522
        %524 = vmatmul.f32.gmra.mxu0 %v248
        %v525 = vpop.f32.mrf.mxu0
        %v526 = vadd.f32 %v413, %v525
        %527 = vmatmul.f32.gmra.mxu0 %v251
        %v528 = vpop.f32.mrf.mxu0
        %v529 = vadd.f32 %v416, %v528
        %530 = vmatmul.f32.gmra.mxu0 %v254
        %v531 = vpop.f32.mrf.mxu0
        %v532 = vadd.f32 %v419, %v531
        %533 = vmatmul.f32.gmra.mxu0 %v257
        %v534 = vpop.f32.mrf.mxu0
        %v535 = vadd.f32 %v422, %v534
        %536 = vmatmul.f32.gmra.mxu0 %v260
        %v537 = vpop.f32.mrf.mxu0
        %v538 = vadd.f32 %v425, %v537
        %539 = vmatmul.f32.gmra.mxu0 %v263
        %v540 = vpop.f32.mrf.mxu0
        %v541 = vadd.f32 %v428, %v540
        %542 = vmatmul.f32.gmra.mxu0 %v266
        %v543 = vpop.f32.mrf.mxu0
        %v544 = vadd.f32 %v431, %v543
        %545 = vmatmul.f32.gmra.mxu0 %v269
        %v546 = vpop.f32.mrf.mxu0
        %v547 = vadd.f32 %v434, %v546
        %548 = vmatmul.f32.gmra.mxu0 %v272
        %v549 = vpop.f32.mrf.mxu0
        %v550 = vadd.f32 %v437, %v549
        %551 = vmatmul.f32.gmra.mxu0 %v275
        %v552 = vpop.f32.mrf.mxu0
        %v553 = vadd.f32 %v440, %v552
        %554 = vmatmul.f32.gmra.mxu0 %v278
        %v555 = vpop.f32.mrf.mxu0
        %v556 = vadd.f32 %v443, %v555
        %557 = vmatmul.f32.gmra.mxu0 %v281
        %v558 = vpop.f32.mrf.mxu0
        %v559 = vadd.f32 %v446, %v558
        %560 = vmatmul.f32.gmra.mxu0 %v284
        %v561 = vpop.f32.mrf.mxu0
        %v562 = vadd.f32 %v449, %v561
        %563 = vmatmul.f32.gmra.mxu0 %v287
        %v564 = vpop.f32.mrf.mxu0
        %v565 = vadd.f32 %v452, %v564
        %566 = vmatmul.f32.gmra.mxu0 %v290
        %v567 = vpop.f32.mrf.mxu0
        %v568 = vadd.f32 %v455, %v567
        %569 = vmatmul.f32.gmra.mxu0 %v293
        %v570 = vpop.f32.mrf.mxu0
        %v571 = vadd.f32 %v458, %v570
        %572 = vmatmul.f32.gmra.mxu0 %v296
        %v573 = vpop.f32.mrf.mxu0
        %v574 = vadd.f32 %v461, %v573
        %575 = vmatmul.f32.gmra.mxu0 %v299
        %v576 = vpop.f32.mrf.mxu0
        %v577 = vadd.f32 %v464, %v576
        %578 = vmatmul.f32.gmra.mxu0 %v302
        %v579 = vpop.f32.mrf.mxu0
        %v580 = vadd.f32 %v467, %v579
        %581 = vmatmul.f32.gmra.mxu0 %v305
        %v582 = vpop.f32.mrf.mxu0
        %v583 = vadd.f32 %v470, %v582
        %584 = vdwg.mxu0
        %585 = vmatpush.msra.mxu0 %v354
        %586 = vmatpush.msra.mxu0 %v353
        %587 = vmatpush.msra.mxu0 %v352
        %588 = vmatpush.msra.mxu0 %v351
        %589 = vmatpush.msra.mxu0 %v350
        %590 = vmatpush.msra.mxu0 %v349
        %591 = vmatpush.msra.mxu0 %v348
        %592 = vmatpush.msra.mxu0 %v347
        %593 = vmatpush.msra.mxu0 %v346
        %594 = vmatpush.msra.mxu0 %v345
        %595 = vmatpush.msra.mxu0 %v344
        %596 = vmatpush.msra.mxu0 %v343
        %597 = vmatpush.msra.mxu0 %v342
        %598 = vmatpush.msra.mxu0 %v341
        %599 = vmatpush.msra.mxu0 %v340
        %600 = vmatpush.msra.mxu0 %v339
        %601 = vmatmul.f32.gmra.mxu0 %v213
        %v602 = vpop.f32.mrf.mxu0
        %v603 = vadd.f32 %v490, %v602
        %604 = vmatmul.f32.gmra.mxu0 %v216
        %v605 = vpop.f32.mrf.mxu0
        %v606 = vadd.f32 %v493, %v605
        %607 = vmatmul.f32.gmra.mxu0 %v219
        %v608 = vpop.f32.mrf.mxu0
        %v609 = vadd.f32 %v496, %v608
        %610 = vmatmul.f32.gmra.mxu0 %v222
        %v611 = vpop.f32.mrf.mxu0
        %v612 = vadd.f32 %v499, %v611
        %613 = vmatmul.f32.gmra.mxu0 %v225
        %v614 = vpop.f32.mrf.mxu0
        %v615 = vadd.f32 %v502, %v614
        %616 = vmatmul.f32.gmra.mxu0 %v228
        %v617 = vpop.f32.mrf.mxu0
        %v618 = vadd.f32 %v505, %v617
        %619 = vmatmul.f32.gmra.mxu0 %v231
        %v620 = vpop.f32.mrf.mxu0
        %v621 = vadd.f32 %v508, %v620
        %622 = vmatmul.f32.gmra.mxu0 %v234
        %v623 = vpop.f32.mrf.mxu0
        %v624 = vadd.f32 %v511, %v623
        %625 = vmatmul.f32.gmra.mxu0 %v237
        %v626 = vpop.f32.mrf.mxu0
        %v627 = vadd.f32 %v514, %v626
        %628 = vmatmul.f32.gmra.mxu0 %v240
        %v629 = vpop.f32.mrf.mxu0
        %v630 = vadd.f32 %v517, %v629
        %631 = vmatmul.f32.gmra.mxu0 %v243
        %v632 = vpop.f32.mrf.mxu0
        %v633 = vadd.f32 %v520, %v632
        %634 = vmatmul.f32.gmra.mxu0 %v246
        %v635 = vpop.f32.mrf.mxu0
        %v636 = vadd.f32 %v523, %v635
        %637 = vmatmul.f32.gmra.mxu0 %v249
        %v638 = vpop.f32.mrf.mxu0
        %v639 = vadd.f32 %v526, %v638
        %640 = vmatmul.f32.gmra.mxu0 %v252
        %v641 = vpop.f32.mrf.mxu0
        %v642 = vadd.f32 %v529, %v641
        %643 = vmatmul.f32.gmra.mxu0 %v255
        %v644 = vpop.f32.mrf.mxu0
        %v645 = vadd.f32 %v532, %v644
        %646 = vmatmul.f32.gmra.mxu0 %v258
        %v647 = vpop.f32.mrf.mxu0
        %v648 = vadd.f32 %v535, %v647
        %649 = vmatmul.f32.gmra.mxu0 %v261
        %v650 = vpop.f32.mrf.mxu0
        %v651 = vadd.f32 %v538, %v650
        %652 = vmatmul.f32.gmra.mxu0 %v264
        %v653 = vpop.f32.mrf.mxu0
        %v654 = vadd.f32 %v541, %v653
        %655 = vmatmul.f32.gmra.mxu0 %v267
        %v656 = vpop.f32.mrf.mxu0
        %v657 = vadd.f32 %v544, %v656
        %658 = vmatmul.f32.gmra.mxu0 %v270
        %v659 = vpop.f32.mrf.mxu0
        %v660 = vadd.f32 %v547, %v659
        %661 = vmatmul.f32.gmra.mxu0 %v273
        %v662 = vpop.f32.mrf.mxu0
        %v663 = vadd.f32 %v550, %v662
        %664 = vmatmul.f32.gmra.mxu0 %v276
        %v665 = vpop.f32.mrf.mxu0
        %v666 = vadd.f32 %v553, %v665
        %667 = vmatmul.f32.gmra.mxu0 %v279
        %v668 = vpop.f32.mrf.mxu0
        %v669 = vadd.f32 %v556, %v668
        %670 = vmatmul.f32.gmra.mxu0 %v282
        %v671 = vpop.f32.mrf.mxu0
        %v672 = vadd.f32 %v559, %v671
        %673 = vmatmul.f32.gmra.mxu0 %v285
        %v674 = vpop.f32.mrf.mxu0
        %v675 = vadd.f32 %v562, %v674
        %676 = vmatmul.f32.gmra.mxu0 %v288
        %v677 = vpop.f32.mrf.mxu0
        %v678 = vadd.f32 %v565, %v677
        %679 = vmatmul.f32.gmra.mxu0 %v291
        %v680 = vpop.f32.mrf.mxu0
        %v681 = vadd.f32 %v568, %v680
        %682 = vmatmul.f32.gmra.mxu0 %v294
        %v683 = vpop.f32.mrf.mxu0
        %v684 = vadd.f32 %v571, %v683
        %685 = vmatmul.f32.gmra.mxu0 %v297
        %v686 = vpop.f32.mrf.mxu0
        %v687 = vadd.f32 %v574, %v686
        %688 = vmatmul.f32.gmra.mxu0 %v300
        %v689 = vpop.f32.mrf.mxu0
        %v690 = vadd.f32 %v577, %v689
        %691 = vmatmul.f32.gmra.mxu0 %v303
        %v692 = vpop.f32.mrf.mxu0
        %v693 = vadd.f32 %v580, %v692
        %694 = vmatmul.f32.gmra.mxu0 %v306
        %v695 = vpop.f32.mrf.mxu0
        %v696 = vadd.f32 %v583, %v695
        %697 = vdwg.mxu0
        %698 = vst [vmem:[%s208] sm:$0xff] %v603
        %699 = vst [vmem:[%s208 + $0x8] sm:$0xff] %v606
        %700 = vst [vmem:[%s208 + $0x10] sm:$0xff] %v609
        %701 = vst [vmem:[%s208 + $0x18] sm:$0xff] %v612
        %702 = vst [vmem:[%s208 + $0x20] sm:$0xff] %v615
        %703 = vst [vmem:[%s208 + $0x28] sm:$0xff] %v618
        %704 = vst [vmem:[%s208 + $0x30] sm:$0xff] %v621
        %705 = vst [vmem:[%s208 + $0x38] sm:$0xff] %v624
        %706 = vst [vmem:[%s208 + $0x40] sm:$0xff] %v627
        %707 = vst [vmem:[%s208 + $0x48] sm:$0xff] %v630
        %708 = vst [vmem:[%s208 + $0x50] sm:$0xff] %v633
        %709 = vst [vmem:[%s208 + $0x58] sm:$0xff] %v636
        %710 = vst [vmem:[%s208 + $0x60] sm:$0xff] %v639
        %711 = vst [vmem:[%s208 + $0x68] sm:$0xff] %v642
        %712 = vst [vmem:[%s208 + $0x70] sm:$0xff] %v645
        %713 = vst [vmem:[%s208 + $0x78] sm:$0xff] %v648
        %714 = vst [vmem:[%s208 + $0x80] sm:$0xff] %v651
        %715 = vst [vmem:[%s208 + $0x88] sm:$0xff] %v654
        %716 = vst [vmem:[%s208 + $0x90] sm:$0xff] %v657
        %717 = vst [vmem:[%s208 + $0x98] sm:$0xff] %v660
        %718 = vst [vmem:[%s208 + $0xa0] sm:$0xff] %v663
        %719 = vst [vmem:[%s208 + $0xa8] sm:$0xff] %v666
        %720 = vst [vmem:[%s208 + $0xb0] sm:$0xff] %v669
        %721 = vst [vmem:[%s208 + $0xb8] sm:$0xff] %v672
        %722 = vst [vmem:[%s208 + $0xc0] sm:$0xff] %v675
        %723 = vst [vmem:[%s208 + $0xc8] sm:$0xff] %v678
        %724 = vst [vmem:[%s208 + $0xd0] sm:$0xff] %v681
        %725 = vst [vmem:[%s208 + $0xd8] sm:$0xff] %v684
        %726 = vst [vmem:[%s208 + $0xe0] sm:$0xff] %v687
        %727 = vst [vmem:[%s208 + $0xe8] sm:$0xff] %v690
        %728 = vst [vmem:[%s208 + $0xf0] sm:$0xff] %v693
        %729 = vst [vmem:[%s208 + $0xf8] sm:$0xff] %v696
        %s730 = sand.u32 %s97, 1
        %s731 = scalar_lea.sflag [#allocation4], %s730
        %s732 = sand.u32 %s97, 1
        %s733 = smul.addr %s732, 256
        %s734 = scalar_lea.vmem [#allocation7], %s733
        // Predicated region
        $region41: #{tpu_custom_call.1} parent=31 // pred_check
          %p735 = pneg %p107
        $region42: #{tpu_custom_call.1} parent=31 // pred_check_branch
          %737 = sbr.rel (%p735) target = $region44
        $region43: #{tpu_custom_call.1} parent=31 // pred_region
          %s738 = smul.u32 32, %s21
          %740 = vsyncadd %s731, 0
          %s741 = smul.addr %s738, 8
          %s742 = scalar_lea.hbm %s3, %s741
          %s743 = sshll.u32 %s734, 4
          %s744 = int_to_ptr.vmem [resolvable:$true] %s743
          %s745 = sshll.u32 %s742, 4
          %s746 = int_to_ptr.hbm [resolvable:$true] %s745
          %751 = dma.vmem_to_hbm [thread:$0]  %s744, 4096, %s746, %s731, 128, 128, 8
        $region44: #{tpu_custom_call.1} parent=31 // pred_fallthru
          _
      $region32: #{tpu_custom_call.1} parent=5 // pred_fallthru
        _
      %p752 = scmp.le.s32.totalorder 2, %s16
      // Predicated region
      $region45: #{tpu_custom_call.1} parent=5 // pred_check
        %p753 = pneg %p752
      $region46: #{tpu_custom_call.1} parent=5 // pred_check_branch
        %755 = sbr.rel (%p753) target = $region48
      $region47: #{tpu_custom_call.1} parent=5 // pred_region
        %s756 = ssub.s32 %s16, 2
        // Predicated region
        $region49: #{tpu_custom_call.1} parent=47 // pred_check
          %p757 = pneg %p113
        $region50: #{tpu_custom_call.1} parent=47 // pred_check_branch
          %759 = sbr.rel (%p757) target = $region52
        $region51: #{tpu_custom_call.1} parent=47 // pred_region
          %s760 = sand.u32 %s98, 1
          %s761 = scalar_lea.sflag [#allocation4], %s760
          %s762 = sand.u32 %s98, 1
          %s763 = smul.addr %s762, 256
          %s764 = scalar_lea.vmem [#allocation7], %s763
          %766 = dma.done %s761, 4096
        $region52: #{tpu_custom_call.1} parent=47 // pred_fallthru
          _
      $region48: #{tpu_custom_call.1} parent=5 // pred_fallthru
        _
    $region6: #{tpu_custom_call.1} parent=1 // loop_footer
      %s20 = sadd.s32 1, %s16
    $region7: #{tpu_custom_call.1} parent=1 // loop_footer_branch
      %15 = sbr.rel target = $region3
    $region8: #{tpu_custom_call.1} parent=1 // loop_exit
      _
    %767 = vsyncpa [#allocation3], 1
    %s768 = scalar_lea.sflag [#allocation3], 1
    %769 = vsyncpa %s768, 1
    %770 = vsyncpa [#allocation6], 1
    %771 = vsyncpa [#allocation4], 1
    %s772 = scalar_lea.sflag [#allocation4], 1
    %773 = vsyncpa %s772, 1

</llo_original>
